<compile_context>
chip_gen: v5e
topology: v5e:2x2
jax: 0.10.0
libtpu: 0.0.40
codegen_flags: <defaults>
</compile_context>

<pallas_src>
import numpy as np
import jax
import jax.numpy as jnp
from jax.experimental import pallas as pl
from jax.experimental.pallas import tpu as pltpu

PAD_IDX_DEFAULT = 0


def _vae_loss_kernel(tgt_ref, lp_ref, mean_ref, log_var_ref,
                     nll_ref, kl_ref, acc_ref):
    """One (R, V) tile of the masked NLL gather-sum, plus a fused KL epilogue.

    Grid = (num_parallel_slices, tiles_per_slice).  Masked rows carry the
    sentinel target -1, which never matches a vocab id, so no row masks are
    needed in the kernel.
    """
    t = pl.program_id(1)
    num_t = pl.num_programs(1)

    lp = lp_ref[...]                        # (R, V) native dtype (f32 / bf16)
    tgt = tgt_ref[...]                      # (R, 1) int32; -1 => ignore row
    rows, vocab = lp.shape

    # Gather log_prob[row, tgt[row]]: iota-compare + select + lane reduce.
    vocab_ids = jax.lax.broadcasted_iota(jnp.int32, (rows, vocab), 1)
    hit = vocab_ids == tgt                                      # (R, V)
    sel = jnp.where(hit, lp, jnp.zeros((), lp.dtype))           # native dtype
    # Lane reduce is exact in the native dtype (<= 1 non-zero per row); only
    # the tiny (R, 1) result is upcast to f32 for the running sum.
    picked = jnp.sum(sel, axis=-1, keepdims=True)               # (R, 1)
    partial = jnp.sum(picked.astype(jnp.float32),
                      axis=0, keepdims=True)                    # (1, 1)

    @pl.when(t == 0)
    def _init():
        acc_ref[...] = jnp.zeros_like(acc_ref)

    acc_ref[...] += partial          # single-vreg accumulator (not (R,1) RMW)

    @pl.when(t == num_t - 1)
    def _finalize():
        nll_ref[0] = acc_ref[...]    # written once per slice
        # KL epilogue (O(B*Z), trivially small) — fused here so there is no
        # second pallas_call launch.  Every slice writes the same value into
        # its own output slot (parallel-axis safe).
        mu = mean_ref[...].astype(jnp.float32)
        lv = log_var_ref[...].astype(jnp.float32)
        kl_ref[0] = -0.5 * jnp.sum(1.0 + lv - mu * mu - jnp.exp(lv),
                                   keepdims=True)


def _vmem_capacity_bytes():
    """Physical VMEM per TensorCore; conservative fallback if unqueryable."""
    try:
        info = pltpu.get_tpu_info()
        for name in ("vmem_capacity_bytes", "vmem_size_bytes", "vmem_bytes"):
            cap = getattr(info, name, None)
            if cap:
                return int(cap)
    except Exception:
        pass
    return 64 * 1024 * 1024          # v7x per-TC VMEM (smallest generation)


def _pick_row_tile(n_rows, vocab, itemsize, vmem_cap):
    """Rows per tile: ~8 MiB of streamed log_prob, bounded so the working set
    (2x double-buffered lp tile + ~3 tile-sized f32/i32 elementwise temps)
    stays under ~70% of this chip's VMEM.  Multiple of 16 (bf16 sublane
    packing; also satisfies f32's 8)."""
    stream_bytes_per_row = vocab * itemsize
    live_bytes_per_row = 2 * stream_bytes_per_row + 3 * vocab * 4
    rows_by_budget = (8 << 20) // max(1, stream_bytes_per_row)
    rows_by_vmem = int(0.7 * vmem_cap) // max(1, live_bytes_per_row)
    rows = max(16, (min(rows_by_budget, rows_by_vmem) // 16) * 16)
    n_rows_pad = -(-n_rows // 16) * 16
    return int(min(rows, max(16, n_rows_pad)))


def vae_loss_forward(log_prob, target, length, mean, log_var, step,
                     anneal_function='logistic', k=0.0025, x0=2500,
                     pad_idx=PAD_IDX_DEFAULT, row_tile=None, num_parallel=None):
    B, S, V = log_prob.shape
    Z = mean.shape[1]
    n_rows = B * S

    # Reference drops positions >= max(length); NLLLoss ignores pad_idx.
    # Fold BOTH into the target stream (tiny O(B*S) op): masked rows get -1.
    max_len = jnp.max(length).astype(jnp.int32)
    pos = jnp.arange(S, dtype=jnp.int32)[None, :]
    tgt = target.astype(jnp.int32)
    tgt_eff = jnp.where(jnp.logical_and(pos < max_len, tgt != pad_idx),
                        tgt, jnp.int32(-1))

    lp2d = log_prob.reshape(n_rows, V)       # free reshape (contiguous)

    vmem_cap = _vmem_capacity_bytes()
    itemsize = jnp.dtype(log_prob.dtype).itemsize
    rows_per_tile = (int(row_tile) if row_tile is not None
                     else _pick_row_tile(n_rows, V, itemsize, vmem_cap))
    assert rows_per_tile % 16 == 0, "row tile must be a multiple of 16"

    n_tiles = -(-n_rows // rows_per_tile)
    if num_parallel is None:
        # Always split 2-way when there is more than one tile so the grid's
        # parallel axis can shard across both TensorCores on v7x; on
        # single-TC chips the extra slice is just one more loop step.
        nc = 2 if n_tiles >= 2 else 1
    else:
        nc = max(1, int(num_parallel))
    nc = min(nc, n_tiles)
    T = -(-n_tiles // nc)                    # tiles per slice (ceil)

    # Pad the target stream (with the -1 sentinel) to the full grid extent so
    # ragged edge tiles and the padded last grid step are masked purely by the
    # sentinel — the big log_prob stream itself is never padded or copied.
    total_rows = nc * T * rows_per_tile
    tgt2d = jnp.pad(tgt_eff.reshape(n_rows, 1),
                    ((0, total_rows - n_rows), (0, 0)), constant_values=-1)

    # Generation-aware VMEM limit: enough for the chosen tiles plus headroom,
    # but never more than ~85% of this chip's physical VMEM.
    lp_tile_bytes = rows_per_tile * V * itemsize
    est = (2 * lp_tile_bytes + 3 * rows_per_tile * V * 4
           + 2 * rows_per_tile * 4 + (4 << 20))
    vmem_limit = int(min(int(0.85 * vmem_cap), max(48 << 20, est)))

    last_lp_block = n_tiles - 1

    nll_parts, kl_parts = pl.pallas_call(
        _vae_loss_kernel,
        out_shape=(jax.ShapeDtypeStruct((nc, 1, 1), jnp.float32),
                   jax.ShapeDtypeStruct((nc, 1, 1), jnp.float32)),
        grid_spec=pltpu.PrefetchScalarGridSpec(
            num_scalar_prefetch=0,
            grid=(nc, T),
            in_specs=[
                pl.BlockSpec((rows_per_tile, 1),
                             lambda c, t, T=T: (c * T + t, 0)),
                # Padded grid steps (only when n_tiles is odd) clamp to the
                # last real block; their targets are all -1 so they add 0.
                pl.BlockSpec((rows_per_tile, V),
                             lambda c, t, T=T, L=last_lp_block:
                                 (jnp.minimum(c * T + t, L), 0)),
                pl.BlockSpec((B, Z), lambda c, t: (0, 0)),
                pl.BlockSpec((B, Z), lambda c, t: (0, 0)),
            ],
            out_specs=(
                pl.BlockSpec((1, 1, 1), lambda c, t: (c, 0, 0)),
                pl.BlockSpec((1, 1, 1), lambda c, t: (c, 0, 0)),
            ),
            scratch_shapes=[pltpu.VMEM((1, 1), jnp.float32)],
        ),
        compiler_params=pltpu.CompilerParams(
            dimension_semantics=("parallel", "arbitrary"),
            vmem_limit_bytes=vmem_limit),
    )(tgt2d, lp2d, mean, log_var)

    nll = -jnp.sum(nll_parts)      # <= a couple of partials (one per slice)
    kl = kl_parts[0, 0, 0]         # every slice wrote the same KL value

    # KL annealing weight — host-side Python scalar, matching the PyTorch
    # reference (assumes `step` is a plain number, not a traced value).
    af = anneal_function.lower()
    if af == 'logistic':
        kl_weight = float(1.0 / (1.0 + np.exp(-k * (step - x0))))
    elif af == 'linear':
        kl_weight = min(1, step / x0)
    elif af == 'none':
        kl_weight = 1
    else:
        raise NotImplementedError(
            "Only ['logistic', 'linear', 'none'] are supported")

    return nll, kl, kl_weight


if __name__ == "__main__":
    def reference(log_prob, target, length, mean, log_var, pad_idx=0):
        V = log_prob.shape[-1]
        max_len = int(jnp.max(length))
        lp_t = log_prob[:, :max_len].reshape(-1, V).astype(jnp.float32)
        tg_t = target[:, :max_len].reshape(-1).astype(jnp.int32)
        picked = jnp.take_along_axis(lp_t, tg_t[:, None], axis=1)[:, 0]
        nll = -jnp.sum(jnp.where(tg_t != pad_idx, picked, 0.0))
        kl = -0.5 * jnp.sum(1.0 + log_var - mean ** 2 - jnp.exp(log_var))
        return nll, kl

    key = jax.random.PRNGKey(0)
    ok = True
    # (B, S, V, Z, lengths, row_tile, lp dtype)
    cases = [
        # grid (2, 1): exercises the 2-way parallel split
        (4, 8, 128, 32, [5, 7, 8, 3], 16, jnp.float32),
        # 3 tiles -> nc=2, T=2: accumulation over t + clamped padded grid step
        (2, 24, 128, 16, [20, 13], 16, jnp.float32),
        # bf16 streaming path (half the HBM bytes), native-dtype lane reduce
        (2, 24, 128, 16, [20, 13], 16, jnp.bfloat16),
    ]
    for ci, (B, S, V, Z, lens, rt, dt) in enumerate(cases):
        key, k1, k2, k3, k4 = jax.random.split(key, 5)
        logits = jax.random.normal(k1, (B, S, V), dtype=jnp.float32)
        log_prob = jax.nn.log_softmax(logits, axis=-1).astype(dt)
        length = jnp.array(lens, dtype=jnp.int32)
        raw_tgt = jax.random.randint(k2, (B, S), 1, V, dtype=jnp.int32)
        pos = jnp.arange(S)[None, :]
        target = jnp.where(pos < length[:, None], raw_tgt, PAD_IDX_DEFAULT)
        mean = jax.random.normal(k3, (B, Z), dtype=jnp.float32)
        log_var = jax.random.normal(k4, (B, Z), dtype=jnp.float32)

        nll, kl, kl_w = vae_loss_forward(log_prob, target, length, mean,
                                         log_var, step=2500, row_tile=rt)
        jax.block_until_ready((nll, kl))
        nll_ref, kl_ref = reference(log_prob, target, length, mean, log_var)
        ok &= bool(np.allclose(float(nll), float(nll_ref), rtol=1e-4, atol=1e-3))
        ok &= bool(np.allclose(float(kl), float(kl_ref), rtol=1e-4, atol=1e-3))
        ok &= abs(kl_w - 0.5) < 1e-6

        if ci == 0:
            # Also exercise the auto tile-size path (single big block, nc=1).
            nll2, kl2, _ = vae_loss_forward(log_prob, target, length, mean,
                                            log_var, step=2500)
            jax.block_until_ready((nll2, kl2))
            ok &= bool(np.allclose(float(nll2), float(nll_ref),
                                   rtol=1e-4, atol=1e-3))

    if ok:
        print("KERNEL_OK")
    else:
        raise SystemExit("FAIL: Pallas result does not match reference")
</pallas_src>

<mosaic_0001>
module attributes {stable_mosaic.version = 11 : i64} {
  func.func @_vae_loss_kernel(%arg0: i32, %arg1: i32, %arg2: memref<16x1xi32, #tpu.memory_space<vmem>>, %arg3: memref<16x128xf32, #tpu.memory_space<vmem>>, %arg4: memref<4x32xf32, #tpu.memory_space<vmem>>, %arg5: memref<4x32xf32, #tpu.memory_space<vmem>>, %arg6: memref<1x1x1xf32, #tpu.memory_space<vmem>>, %arg7: memref<1x1x1xf32, #tpu.memory_space<vmem>>, %arg8: memref<1x1xf32, #tpu.memory_space<vmem>>) attributes {dimension_semantics = [#tpu.dimension_semantics<parallel>, #tpu.dimension_semantics<arbitrary>], iteration_bounds = array<i64: 2, 1>, scalar_prefetch = 0 : i64, scratch_operands = 1 : i64, tpu.core_type = #tpu.core_type<tc>, window_params = [{transform_indices = @transform_0, window_bounds = array<i64: 16, 1>}, {transform_indices = @transform_1, window_bounds = array<i64: 16, 128>}, {pipeline_mode = #tpu.pipeline_mode<synchronous>, transform_indices = @transform_2, window_bounds = array<i64: 4, 32>}, {pipeline_mode = #tpu.pipeline_mode<synchronous>, transform_indices = @transform_3, window_bounds = array<i64: 4, 32>}, {transform_indices = @transform_4, window_bounds = array<i64: 1, 1, 1>}, {transform_indices = @transform_5, window_bounds = array<i64: 1, 1, 1>}]} {
    %c0 = arith.constant 0 : index
    %c0_0 = arith.constant 0 : index
    %0 = vector.load %arg3[%c0, %c0_0] : memref<16x128xf32, #tpu.memory_space<vmem>>, vector<16x128xf32>
    %c0_1 = arith.constant 0 : index
    %c0_2 = arith.constant 0 : index
    %1 = vector.load %arg2[%c0_1, %c0_2] : memref<16x1xi32, #tpu.memory_space<vmem>>, vector<16x1xi32>
    %2 = tpu.iota {dimensions = array<i32: 1>} : vector<16x128xi32>
    %3 = vector.broadcast %1 : vector<16x1xi32> to vector<16x128xi32>
    %4 = arith.cmpi eq, %2, %3 : vector<16x128xi32>
    %cst = arith.constant 0.000000e+00 : f32
    %5 = vector.broadcast %cst : f32 to vector<16x128xf32>
    %6 = arith.select %4, %0, %5 : vector<16x128xi1>, vector<16x128xf32>
    %cst_3 = arith.constant dense<0.000000e+00> : vector<16xf32>
    %7 = vector.multi_reduction <add>, %6, %cst_3 [1] : vector<16x128xf32> to vector<16xf32>
    %8 = vector.shape_cast %7 : vector<16xf32> to vector<16x1xf32>
    %cst_4 = arith.constant dense<0.000000e+00> : vector<1xf32>
    %9 = vector.multi_reduction <add>, %8, %cst_4 [0] : vector<16x1xf32> to vector<1xf32>
    %10 = vector.shape_cast %9 : vector<1xf32> to vector<1x1xf32>
    %c0_i32 = arith.constant 0 : i32
    %11 = arith.cmpi eq, %arg1, %c0_i32 : i32
    %12 = arith.extui %11 : i1 to i32
    %c0_i32_5 = arith.constant 0 : i32
    %13 = arith.cmpi ne, %12, %c0_i32_5 : i32
    scf.if %13 {
      %cst_12 = arith.constant 0.000000e+00 : f32
      %20 = vector.broadcast %cst_12 : f32 to vector<1x1xf32>
      %c0_13 = arith.constant 0 : index
      %c0_14 = arith.constant 0 : index
      %21 = vector.load %arg8[%c0_13, %c0_14] : memref<1x1xf32, #tpu.memory_space<vmem>>, vector<1x1xf32>
      tpu.vector_store %arg8[%c0_13, %c0_14], %20 {strides = array<i32>} : memref<1x1xf32, #tpu.memory_space<vmem>>, vector<1x1xf32>,
    } else {
    }
    %c0_6 = arith.constant 0 : index
    %c0_7 = arith.constant 0 : index
    %14 = vector.load %arg8[%c0_6, %c0_7] : memref<1x1xf32, #tpu.memory_space<vmem>>, vector<1x1xf32>
    %15 = arith.addf %14, %10 : vector<1x1xf32>
    %c0_8 = arith.constant 0 : index
    %c0_9 = arith.constant 0 : index
    %16 = vector.load %arg8[%c0_8, %c0_9] : memref<1x1xf32, #tpu.memory_space<vmem>>, vector<1x1xf32>
    tpu.vector_store %arg8[%c0_8, %c0_9], %15 {strides = array<i32>} : memref<1x1xf32, #tpu.memory_space<vmem>>, vector<1x1xf32>,
    %c0_i32_10 = arith.constant 0 : i32
    %17 = arith.cmpi eq, %arg1, %c0_i32_10 : i32
    %18 = arith.extui %17 : i1 to i32
    %c0_i32_11 = arith.constant 0 : i32
    %19 = arith.cmpi ne, %18, %c0_i32_11 : i32
    scf.if %19 {
      %c0_12 = arith.constant 0 : index
      %c0_13 = arith.constant 0 : index
      %20 = vector.load %arg8[%c0_12, %c0_13] : memref<1x1xf32, #tpu.memory_space<vmem>>, vector<1x1xf32>
      %c0_14 = arith.constant 0 : index
      %c0_15 = arith.constant 0 : index
      %c0_16 = arith.constant 0 : index
      %21 = vector.load %arg6[%c0_14, %c0_15, %c0_16] : memref<1x1x1xf32, #tpu.memory_space<vmem>>, vector<1x1x1xf32>
      %22 = vector.shape_cast %21 : vector<1x1x1xf32> to vector<1x1xf32>
      %23 = vector.shape_cast %20 : vector<1x1xf32> to vector<1x1x1xf32>
      tpu.vector_store %arg6[%c0_14, %c0_15, %c0_16], %23 {strides = array<i32>} : memref<1x1x1xf32, #tpu.memory_space<vmem>>, vector<1x1x1xf32>,
      %c0_17 = arith.constant 0 : index
      %c0_18 = arith.constant 0 : index
      %24 = vector.load %arg4[%c0_17, %c0_18] : memref<4x32xf32, #tpu.memory_space<vmem>>, vector<4x32xf32>
      %c0_19 = arith.constant 0 : index
      %c0_20 = arith.constant 0 : index
      %25 = vector.load %arg5[%c0_19, %c0_20] : memref<4x32xf32, #tpu.memory_space<vmem>>, vector<4x32xf32>
      %cst_21 = arith.constant 1.000000e+00 : f32
      %26 = vector.broadcast %cst_21 : f32 to vector<4x32xf32>
      %27 = arith.addf %26, %25 : vector<4x32xf32>
      %28 = arith.mulf %24, %24 : vector<4x32xf32>
      %29 = arith.subf %27, %28 : vector<4x32xf32>
      %30 = math.exp %25 : vector<4x32xf32>
      %31 = arith.subf %29, %30 : vector<4x32xf32>
      %32 = vector.shape_cast %31 : vector<4x32xf32> to vector<1x4x32xf32>
      %cst_22 = arith.constant dense<0.000000e+00> : vector<1xf32>
      %33 = vector.multi_reduction <add>, %32, %cst_22 [1, 2] : vector<1x4x32xf32> to vector<1xf32>
      %34 = vector.shape_cast %33 : vector<1xf32> to vector<1x1x1xf32>
      %35 = vector.extract %34[0, 0, 0] : f32 from vector<1x1x1xf32>
      %36 = vector.broadcast %35 : f32 to vector<1x1xf32>
      %cst_23 = arith.constant -5.000000e-01 : f32
      %37 = vector.broadcast %cst_23 : f32 to vector<1x1xf32>
      %38 = arith.mulf %37, %36 : vector<1x1xf32>
      %c0_24 = arith.constant 0 : index
      %c0_25 = arith.constant 0 : index
      %c0_26 = arith.constant 0 : index
      %39 = vector.load %arg7[%c0_24, %c0_25, %c0_26] : memref<1x1x1xf32, #tpu.memory_space<vmem>>, vector<1x1x1xf32>
      %40 = vector.shape_cast %39 : vector<1x1x1xf32> to vector<1x1xf32>
      %41 = vector.shape_cast %38 : vector<1x1xf32> to vector<1x1x1xf32>
      tpu.vector_store %arg7[%c0_24, %c0_25, %c0_26], %41 {strides = array<i32>} : memref<1x1x1xf32, #tpu.memory_space<vmem>>, vector<1x1x1xf32>,
    } else {
    }
    return
  }
  func.func @transform_0(%arg0: i32, %arg1: i32) -> (i32, i32) {
    %c1_i32 = arith.constant 1 : i32
    %0 = arith.muli %arg0, %c1_i32 : i32
    %1 = arith.addi %0, %arg1 : i32
    %c0_i32 = arith.constant 0 : i32
    %c0_i32_0 = arith.constant 0 : i32
    return %1, %c0_i32 : i32, i32
  }
  func.func @transform_1(%arg0: i32, %arg1: i32) -> (i32, i32) {
    %c1_i32 = arith.constant 1 : i32
    %0 = arith.muli %arg0, %c1_i32 : i32
    %1 = arith.addi %0, %arg1 : i32
    %c1_i32_0 = arith.constant 1 : i32
    %2 = arith.minsi %1, %c1_i32_0 : i32
    %c0_i32 = arith.constant 0 : i32
    %c0_i32_1 = arith.constant 0 : i32
    return %2, %c0_i32 : i32, i32
  }
  func.func @transform_2(%arg0: i32, %arg1: i32) -> (i32, i32) {
    %c0_i32 = arith.constant 0 : i32
    %c0_i32_0 = arith.constant 0 : i32
    %c0_i32_1 = arith.constant 0 : i32
    return %c0_i32, %c0_i32_0 : i32, i32
  }
  func.func @transform_3(%arg0: i32, %arg1: i32) -> (i32, i32) {
    %c0_i32 = arith.constant 0 : i32
    %c0_i32_0 = arith.constant 0 : i32
    %c0_i32_1 = arith.constant 0 : i32
    return %c0_i32, %c0_i32_0 : i32, i32
  }
  func.func @transform_4(%arg0: i32, %arg1: i32) -> (i32, i32, i32) {
    %c0_i32 = arith.constant 0 : i32
    %c0_i32_0 = arith.constant 0 : i32
    %c0_i32_1 = arith.constant 0 : i32
    return %arg0, %c0_i32, %c0_i32_0 : i32, i32, i32
  }
  func.func @transform_5(%arg0: i32, %arg1: i32) -> (i32, i32, i32) {
    %c0_i32 = arith.constant 0 : i32
    %c0_i32_0 = arith.constant 0 : i32
    %c0_i32_1 = arith.constant 0 : i32
    return %arg0, %c0_i32, %c0_i32_0 : i32, i32, i32
  }
}

</mosaic_0001>

<llo_original>
// kernel: tpu_custom_call.1
$region0: #{tpu_custom_call.1}
  #allocation0 [shape = 'u32[]', space=smem, size = 0x4, offset = 0x4, fixed_abs, tag = 'smem constant byte address 0x4 - core index']
  #allocation1 [shape = 'u32[72,128]{1,0:T(1,128)}', space=vmem, size = 0x9000, scoped, tag = 'internal scratch']
  #allocation2 [shape = 'f32[1,1]{1,0:T(1,128)}', space=vmem, size = 0x200, scoped, tag = 'scratch operand']
  %s0 = inlined_call_operand.vmem [shape: s32[32,1], index: 0, kind: input, shape index: {}]
  %s1 = inlined_call_operand.vmem [shape: f32[32,128], index: 1, kind: input, shape index: {}]
  %s2 = inlined_call_operand.hbm [shape: f32[4,32], index: 2, kind: input, shape index: {}]
  %s3 = inlined_call_operand.hbm [shape: f32[4,32], index: 3, kind: input, shape index: {}]
  %s4 = inlined_call_operand.vmem [shape: f32[2,1,1], index: 4, kind: output, shape index: {0}]
  %s5 = inlined_call_operand.vmem [shape: f32[2,1,1], index: 5, kind: output, shape index: {1}]
  %6 = xla_tuple %s4, %s5
  %s7 = sld [smem:[#allocation0]]
  $region73: #{tpu_custom_call.1} parent=0
    _
  %s9 = ssub.s32 1, %s7
  %s10 = scalar_select 0, %s9, %s7
  $region1: #{tpu_custom_call.1} parent=0
    #allocation3 [shape = 'u8[2048]{0}', space=vmem, size = 0x800, scoped, tag = 'input window, operand 2, single buffered']
    #allocation4 [shape = 's32[2]{0}', space=sflag, size = 0x8, scoped, tag = 'scoped memory for tpu_custom_call.1']
    #allocation5 [shape = 'u8[2048]{0}', space=vmem, size = 0x800, scoped, tag = 'input window, operand 3, single buffered']
    #allocation6 [shape = 's32[1]{0}', space=sflag, size = 0x4, scoped, tag = 'scoped memory for tpu_custom_call.1']
    %11 = vsyncpa [#allocation4], 0
    %12 = vsyncpa [#allocation6], 0
    loop: start=0, step=1, limit=4
    $region2: #{tpu_custom_call.1} parent=1 // loop_pre_header
      _
    $region3: #{tpu_custom_call.1} parent=1 // loop_header
      %s14 = sphi 0, %s18
      %p15 = scmp.ge.s32.totalorder %s14, 4
      %s21 = sphi 0, %s33
      %s22 = sphi 0, %s29
      %s23 = sphi 0, %s21
      %s24 = sphi 0, %s22
      %s25 = sphi 0, %s23
      %s26 = sphi 0, %s24
      %s38 = sphi 0, %s40
      %s41 = sphi 0, %s38
      %s42 = sphi 0, %s41
      %s58 = sphi 0, %s42
      %s70 = sphi 0, %s72
      %s73 = sphi 0, %s70
      %s74 = sphi 0, %s73
      %s90 = sphi 0, %s74
      %s94 = sphi 0, %s94
      %s96 = sphi 0, %s94
      %s97 = sphi 0, %s96
      %s111 = sphi 0, %s97
      %s115 = sphi 0, %s115
      %s117 = sphi 0, %s115
      %s118 = sphi 0, %s117
      %s132 = sphi 0, %s118
      %s138 = sphi 0, %s140
      %s141 = sphi 0, %s138
      %s142 = sphi 0, %s141
      %s158 = sphi 0, %s142
      %s164 = sphi 0, %s166
      %s167 = sphi 0, %s164
      %s168 = sphi 0, %s167
      %s184 = sphi 0, %s168
    $region4: #{tpu_custom_call.1} parent=1 // loop_header_branch
      %17 = sbr.rel (%p15) target = $region8
    $region5: #{tpu_custom_call.1} parent=1 // loop_body
      %s19 = ssub.s32 %s14, 1
      %s20 = ssub.s32 %s14, 2
      %s27 = sadd.s32 1, %s22
      %p28 = scmp.ge.s32.totalorder %s27, 1
      %s29 = scalar_select %p28, 0, %s27
      %s30 = sadd.s32 1, %s21
      %s31 = scalar_select %p28, %s30, %s21
      %p32 = scmp.ge.s32.totalorder %s31, 2
      %s33 = scalar_select %p32, 0, %s31
      %s34 = sadd.s32 %s21, %s22
      %s35 = sadd.s32 %s33, %s29
      %s36 = ssub.s32 %s34, %s35
      %p37 = scmp.eq.s32.totalorder %s36, 0
      %s39 = sadd.s32 %s38, 1
      %s40 = scalar_select %p37, %s38, %s39
      %p43 = pneg %p37
      %p44 = scmp.eq.s32.totalorder %s14, 1
      %p45 = por %p43, %p44
      %p46 = scmp.ne.s32.totalorder %s38, %s41
      %p47 = scmp.eq.s32.totalorder %s14, 0
      %p48 = por %p46, %p47
      %p49 = scmp.ne.s32.totalorder %s38, %s41
      %p50 = scmp.eq.s32.totalorder %s19, 1
      %p51 = por %p49, %p50
      %p52 = scmp.ne.s32.totalorder %s41, %s42
      %p53 = scmp.eq.s32.totalorder %s19, 0
      %p54 = por %p52, %p53
      %p55 = scmp.ne.s32.totalorder %s41, %s42
      %p56 = scmp.eq.s32.totalorder %s20, 1
      %p57 = por %p55, %p56
      %p59 = scmp.ne.s32.totalorder %s42, %s58
      %p60 = scmp.eq.s32.totalorder %s20, 0
      %p61 = por %p59, %p60
      %s62 = sadd.s32 %s21, %s22
      %p63 = scmp.lt.s32.totalorder %s62, 1
      %s64 = scalar_select %p63, %s62, 1
      %s65 = sadd.s32 %s33, %s29
      %p66 = scmp.lt.s32.totalorder %s65, 1
      %s67 = scalar_select %p66, %s65, 1
      %s68 = ssub.s32 %s64, %s67
      %p69 = scmp.eq.s32.totalorder %s68, 0
      %s71 = sadd.s32 %s70, 1
      %s72 = scalar_select %p69, %s70, %s71
      %p75 = pneg %p69
      %p76 = scmp.eq.s32.totalorder %s14, 1
      %p77 = por %p75, %p76
      %p78 = scmp.ne.s32.totalorder %s70, %s73
      %p79 = scmp.eq.s32.totalorder %s14, 0
      %p80 = por %p78, %p79
      %p81 = scmp.ne.s32.totalorder %s70, %s73
      %p82 = scmp.eq.s32.totalorder %s19, 1
      %p83 = por %p81, %p82
      %p84 = scmp.ne.s32.totalorder %s73, %s74
      %p85 = scmp.eq.s32.totalorder %s19, 0
      %p86 = por %p84, %p85
      %p87 = scmp.ne.s32.totalorder %s73, %s74
      %p88 = scmp.eq.s32.totalorder %s20, 1
      %p89 = por %p87, %p88
      %p91 = scmp.ne.s32.totalorder %s74, %s90
      %p92 = scmp.eq.s32.totalorder %s20, 0
      %p93 = por %p91, %p92
      %s95 = sadd.s32 %s94, 1
      %p98 = scmp.eq.s32.totalorder %s14, 1
      %p99 = scmp.ne.s32.totalorder %s94, %s96
      %p100 = scmp.eq.s32.totalorder %s14, 0
      %p101 = por %p99, %p100
      %p102 = scmp.ne.s32.totalorder %s94, %s96
      %p103 = scmp.eq.s32.totalorder %s19, 1
      %p104 = por %p102, %p103
      %p105 = scmp.ne.s32.totalorder %s96, %s97
      %p106 = scmp.eq.s32.totalorder %s19, 0
      %p107 = por %p105, %p106
      %p108 = scmp.ne.s32.totalorder %s96, %s97
      %p109 = scmp.eq.s32.totalorder %s20, 1
      %p110 = por %p108, %p109
      %p112 = scmp.ne.s32.totalorder %s97, %s111
      %p113 = scmp.eq.s32.totalorder %s20, 0
      %p114 = por %p112, %p113
      %s116 = sadd.s32 %s115, 1
      %p119 = scmp.eq.s32.totalorder %s14, 1
      %p120 = scmp.ne.s32.totalorder %s115, %s117
      %p121 = scmp.eq.s32.totalorder %s14, 0
      %p122 = por %p120, %p121
      %p123 = scmp.ne.s32.totalorder %s115, %s117
      %p124 = scmp.eq.s32.totalorder %s19, 1
      %p125 = por %p123, %p124
      %p126 = scmp.ne.s32.totalorder %s117, %s118
      %p127 = scmp.eq.s32.totalorder %s19, 0
      %p128 = por %p126, %p127
      %p129 = scmp.ne.s32.totalorder %s117, %s118
      %p130 = scmp.eq.s32.totalorder %s20, 1
      %p131 = por %p129, %p130
      %p133 = scmp.ne.s32.totalorder %s118, %s132
      %p134 = scmp.eq.s32.totalorder %s20, 0
      %p135 = por %p133, %p134
      %s136 = ssub.s32 %s21, %s33
      %p137 = scmp.eq.s32.totalorder %s136, 0
      %s139 = sadd.s32 %s138, 1
      %s140 = scalar_select %p137, %s138, %s139
      %p143 = pneg %p137
      %p144 = scmp.eq.s32.totalorder %s14, 1
      %p145 = por %p143, %p144
      %p146 = scmp.ne.s32.totalorder %s138, %s141
      %p147 = scmp.eq.s32.totalorder %s14, 0
      %p148 = por %p146, %p147
      %p149 = scmp.ne.s32.totalorder %s138, %s141
      %p150 = scmp.eq.s32.totalorder %s19, 1
      %p151 = por %p149, %p150
      %p152 = scmp.ne.s32.totalorder %s141, %s142
      %p153 = scmp.eq.s32.totalorder %s19, 0
      %p154 = por %p152, %p153
      %p155 = scmp.ne.s32.totalorder %s141, %s142
      %p156 = scmp.eq.s32.totalorder %s20, 1
      %p157 = por %p155, %p156
      %p159 = scmp.ne.s32.totalorder %s142, %s158
      %p160 = scmp.eq.s32.totalorder %s20, 0
      %p161 = por %p159, %p160
      %s162 = ssub.s32 %s21, %s33
      %p163 = scmp.eq.s32.totalorder %s162, 0
      %s165 = sadd.s32 %s164, 1
      %s166 = scalar_select %p163, %s164, %s165
      %p169 = pneg %p163
      %p170 = scmp.eq.s32.totalorder %s14, 1
      %p171 = por %p169, %p170
      %p172 = scmp.ne.s32.totalorder %s164, %s167
      %p173 = scmp.eq.s32.totalorder %s14, 0
      %p174 = por %p172, %p173
      %p175 = scmp.ne.s32.totalorder %s164, %s167
      %p176 = scmp.eq.s32.totalorder %s19, 1
      %p177 = por %p175, %p176
      %p178 = scmp.ne.s32.totalorder %s167, %s168
      %p179 = scmp.eq.s32.totalorder %s19, 0
      %p180 = por %p178, %p179
      %p181 = scmp.ne.s32.totalorder %s167, %s168
      %p182 = scmp.eq.s32.totalorder %s20, 1
      %p183 = por %p181, %p182
      %p185 = scmp.ne.s32.totalorder %s168, %s184
      %p186 = scmp.eq.s32.totalorder %s20, 0
      %p187 = por %p185, %p186
      %p188 = scmp.le.s32.totalorder 1, %s14
      %p189 = scmp.lt.s32.totalorder %s14, 3
      %p190 = pnand %p188, %p189
      %p191 = pneg %p190
      // Predicated region
      $region9: #{tpu_custom_call.1} parent=5 // pred_check
        _
      $region10: #{tpu_custom_call.1} parent=5 // pred_check_branch
        %193 = sbr.rel (%p190) target = $region12
      $region11: #{tpu_custom_call.1} parent=5 // pred_region
        %s194 = ssub.s32 %s14, 1
        // Predicated region
        $region13: #{tpu_custom_call.1} parent=11 // pred_check
          %p195 = pneg %p107
        $region14: #{tpu_custom_call.1} parent=11 // pred_check_branch
          %197 = sbr.rel (%p195) target = $region16
        $region15: #{tpu_custom_call.1} parent=11 // pred_region
          %199 = vsyncadd [#allocation4], 0
          %s201 = sshll.u32 %s2, 4
          %s202 = int_to_ptr.hbm [resolvable:$true] %s201
          %s203 = sshll.u32 [#allocation3], 4
          %s204 = int_to_ptr.vmem [resolvable:$true] %s203
          %206 = dma.hbm_to_vmem [thread:$0]  %s202, 64, %s204, [#allocation4]
        $region16: #{tpu_custom_call.1} parent=11 // pred_fallthru
          _
        // Predicated region
        $region17: #{tpu_custom_call.1} parent=11 // pred_check
          %p207 = pneg %p128
        $region18: #{tpu_custom_call.1} parent=11 // pred_check_branch
          %209 = sbr.rel (%p207) target = $region20
        $region19: #{tpu_custom_call.1} parent=11 // pred_region
          %211 = vsyncadd [#allocation6], 0
          %s213 = sshll.u32 %s3, 4
          %s214 = int_to_ptr.hbm [resolvable:$true] %s213
          %s215 = sshll.u32 [#allocation5], 4
          %s216 = int_to_ptr.vmem [resolvable:$true] %s215
          %218 = dma.hbm_to_vmem [thread:$0]  %s214, 64, %s216, [#allocation6]
        $region20: #{tpu_custom_call.1} parent=11 // pred_fallthru
          _
      $region12: #{tpu_custom_call.1} parent=5 // pred_fallthru
        _
      %p219 = scmp.lt.s32.totalorder %s14, 2
      // Predicated region
      $region21: #{tpu_custom_call.1} parent=5 // pred_check
        %p220 = pneg %p219
      $region22: #{tpu_custom_call.1} parent=5 // pred_check_branch
        %222 = sbr.rel (%p220) target = $region24
      $region23: #{tpu_custom_call.1} parent=5 // pred_region
        // Predicated region
        $region25: #{tpu_custom_call.1} parent=23 // pred_check
          %p223 = pneg %p48
        $region26: #{tpu_custom_call.1} parent=23 // pred_check_branch
          %225 = sbr.rel (%p223) target = $region28
        $region27: #{tpu_custom_call.1} parent=23 // pred_region
          %s226 = sadd.s32 %s21, %s22
          %s227 = smul.u32 2, %s226
          %p228 = scmp.lt.s32.totalorder %s227, 3
          %s229 = scalar_select %p228, %s227, 3
          %s230 = smul.addr %s229, 8
          %s231 = scalar_lea.vmem %s0, %s230
          %s232 = sadd.s32 %s21, %s22
          %s233 = smul.u32 2, %s232
        $region28: #{tpu_custom_call.1} parent=23 // pred_fallthru
          _
        // Predicated region
        $region29: #{tpu_custom_call.1} parent=23 // pred_check
          %p234 = pneg %p80
        $region30: #{tpu_custom_call.1} parent=23 // pred_check_branch
          %236 = sbr.rel (%p234) target = $region32
        $region31: #{tpu_custom_call.1} parent=23 // pred_region
          %s237 = sadd.s32 %s21, %s22
          %p238 = scmp.lt.s32.totalorder %s237, 1
          %s239 = scalar_select %p238, %s237, 1
          %s240 = smul.u32 2, %s239
          %p241 = scmp.lt.s32.totalorder %s240, 3
          %s242 = scalar_select %p241, %s240, 3
          %s243 = smul.addr %s242, 8
          %s244 = scalar_lea.vmem %s1, %s243
          %s245 = sadd.s32 %s21, %s22
          %p246 = scmp.lt.s32.totalorder %s245, 1
          %s247 = scalar_select %p246, %s245, 1
          %s248 = smul.u32 2, %s247
        $region32: #{tpu_custom_call.1} parent=23 // pred_fallthru
          _
      $region24: #{tpu_custom_call.1} parent=5 // pred_fallthru
        _
      %p249 = scmp.le.s32.totalorder 1, %s14
      %p250 = scmp.lt.s32.totalorder %s14, 3
      %p251 = pnand %p249, %p250
      %p252 = pneg %p251
      // Predicated region
      $region33: #{tpu_custom_call.1} parent=5 // pred_check
        _
      $region34: #{tpu_custom_call.1} parent=5 // pred_check_branch
        %254 = sbr.rel (%p251) target = $region36
      $region35: #{tpu_custom_call.1} parent=5 // pred_region
        %s255 = ssub.s32 %s14, 1
        // Predicated region
        $region37: #{tpu_custom_call.1} parent=35 // pred_check
          %p256 = pneg %p107
        $region38: #{tpu_custom_call.1} parent=35 // pred_check_branch
          %258 = sbr.rel (%p256) target = $region40
        $region39: #{tpu_custom_call.1} parent=35 // pred_region
          %260 = dma.done [#allocation4], 64
        $region40: #{tpu_custom_call.1} parent=35 // pred_fallthru
          _
        // Predicated region
        $region41: #{tpu_custom_call.1} parent=35 // pred_check
          %p261 = pneg %p128
        $region42: #{tpu_custom_call.1} parent=35 // pred_check_branch
          %263 = sbr.rel (%p261) target = $region44
        $region43: #{tpu_custom_call.1} parent=35 // pred_region
          %265 = dma.done [#allocation6], 64
        $region44: #{tpu_custom_call.1} parent=35 // pred_fallthru
          _
        %s266 = sadd.s32 %s23, %s24
        %s267 = smul.u32 2, %s266
        %p268 = scmp.lt.s32.totalorder %s267, 3
        %s269 = scalar_select %p268, %s267, 3
        %s270 = smul.addr %s269, 8
        %s271 = scalar_lea.vmem %s0, %s270
        %p272 = pneg %p54
        %p273 = pneg %p51
        %s274 = sadd.s32 %s23, %s24
        %p275 = scmp.lt.s32.totalorder %s274, 1
        %s276 = scalar_select %p275, %s274, 1
        %s277 = smul.u32 2, %s276
        %p278 = scmp.lt.s32.totalorder %s277, 3
        %s279 = scalar_select %p278, %s277, 3
        %s280 = smul.addr %s279, 8
        %s281 = scalar_lea.vmem %s1, %s280
        %p282 = pneg %p86
        %p283 = pneg %p83
        %p284 = pneg %p107
        %p285 = pneg %p104
        %p286 = pneg %p128
        %p287 = pneg %p125
        %p288 = pneg %p154
        %p289 = pneg %p151
        %p290 = scmp.lt.s32.totalorder %s23, 1
        %s291 = scalar_select %p290, %s23, 1
        %s292 = scalar_lea.vmem %s4, %s291
        %p293 = pneg %p180
        %p294 = pneg %p177
        %p295 = scmp.lt.s32.totalorder %s23, 1
        %s296 = scalar_select %p295, %s23, 1
        %s297 = scalar_lea.vmem %s5, %s296
        %s298 = sadd.s32 %s23, %s24
        %s299 = smul.u32 2, %s298
        %p300 = scmp.lt.s32.totalorder %s299, 3
        %s301 = scalar_select %p300, %s299, 3
        %s302 = smul.addr %s301, 8
        %s303 = scalar_lea.vmem %s0, %s302
        %s304 = sadd.s32 %s23, %s24
        %s305 = smul.u32 2, %s304
        %s306 = sadd.s32 %s23, %s24
        %p307 = scmp.lt.s32.totalorder %s306, 1
        %s308 = scalar_select %p307, %s306, 1
        %s309 = smul.u32 2, %s308
        %p310 = scmp.lt.s32.totalorder %s309, 3
        %s311 = scalar_select %p310, %s309, 3
        %s312 = smul.addr %s311, 8
        %s313 = scalar_lea.vmem %s1, %s312
        %s314 = sadd.s32 %s23, %s24
        %p315 = scmp.lt.s32.totalorder %s314, 1
        %s316 = scalar_select %p315, %s314, 1
        %s317 = smul.u32 2, %s316
        %p318 = scmp.lt.s32.totalorder %s23, 1
        %s319 = scalar_select %p318, %s23, 1
        %s320 = scalar_lea.vmem %s4, %s319
        %p321 = scmp.lt.s32.totalorder %s23, 1
        %s322 = scalar_select %p321, %s23, 1
        %s323 = scalar_lea.vmem %s5, %s322
        %v324 = vld [vmem:[%s313] sm:$0xff]
        %v325 = vld [vmem:[%s313 + $0x8] sm:$0xff]
        %v326 = vld [vmem:[%s303] sm:$0xff]
        %v327 = vld [vmem:[%s303 + $0x8] sm:$0xff]
        %v328 = vlaneseq
        %v329 = vand.u32 %v328, 127
        %330 = vset.pattern.permute.xlu0 0
        %331 = vperm.xlu0 %330, %v326
        %v332 = vpop.permute.xlu0 %331
        %333 = vset.pattern.permute.xlu0 0
        %334 = vperm.xlu0 %333, %v327
        %v335 = vpop.permute.xlu0 %334
        %vm336 = vcmp.eq.s32.totalorder %v329, %v332
        %vm337 = vcmp.eq.s32.totalorder %v329, %v335
        %v338 = vsel %vm336, %v324, 0.0
        %v339 = vsel %vm337, %v325, 0.0
        %340 = vadd.xlane.f32.xlu0 %v338
        %v341 = vpop.xlane.xlu0 %340
        %342 = vadd.xlane.f32.xlu0 %v339
        %v343 = vpop.xlane.xlu0 %342
        %v344 = vadd.f32 %v341, %v343
        %v345 = vrot.slane %v344, 4
        %v346 = vadd.f32 %v344, %v345
        %v347 = vrot.slane %v346, 2
        %v348 = vadd.f32 %v346, %v347
        %v349 = vrot.slane %v348, 1
        %v350 = vadd.f32 %v348, %v349
        %p351 = scmp.eq.s32.totalorder %s24, 0
        // Predicated region
        $region45: #{tpu_custom_call.1} parent=35 // pred_check
          %p352 = pneg %p351
        $region46: #{tpu_custom_call.1} parent=35 // pred_check_branch
          %354 = sbr.rel (%p352) target = $region48
        $region47: #{tpu_custom_call.1} parent=35 // pred_region
          %vm355 = vcmask 0
          %356 = vst.msk [vmem:[#allocation2] sm:$0x1] %vm355, 0.0
        $region48: #{tpu_custom_call.1} parent=35 // pred_fallthru
          _
        %v357 = vld [vmem:[#allocation2] sm:$0x1]
        %v358 = vadd.f32 %v357, %v350
        %vm359 = vcmask 0
        %360 = vst.msk [vmem:[#allocation2] sm:$0x1] %vm359, %v358
        // Predicated region
        $region49: #{tpu_custom_call.1} parent=35 // pred_check
          %p361 = pneg %p351
        $region50: #{tpu_custom_call.1} parent=35 // pred_check_branch
          %363 = sbr.rel (%p361) target = $region52
        $region51: #{tpu_custom_call.1} parent=35 // pred_region
          %v364 = vld [vmem:[#allocation2] sm:$0x1]
          %365 = vst.msk [vmem:[%s320] sm:$0x1] %vm359, %v364
          %v366 = vld [vmem:[#allocation3] sm:$0xf]
          %v367 = vld [vmem:[#allocation5] sm:$0xf]
          %v368 = vadd.f32 %v367, 1.0
          %v369 = vmul.f32 %v366, %v366
          %v370 = vsub.f32 %v368, %v369
          %v371 = vmul.f32 %v367, 1.442695
          %v372 = vpow.pop %v371
          %v373 = vsub.f32 %v370, %v372
          %vm374 = vcmask 257024
          %v375 = vsel %vm374, %v373, 0.0
          %376 = vadd.xlane.f32.xlu0 %v375
          %v377 = vpop.xlane.xlu0 %376
          %v378 = vrot.slane %v377, 4
          %v379 = vadd.f32 %v377, %v378
          %v380 = vrot.slane %v379, 2
          %v381 = vadd.f32 %v379, %v380
          %v382 = vrot.slane %v381, 1
          %v383 = vadd.f32 %v381, %v382
          %s384 = vtos %v383
          %v385 = vstv %s384
          %v386 = vmul.f32 %v385, -0.5
          %387 = vst.msk [vmem:[%s323] sm:$0x1] %vm359, %v386
        $region52: #{tpu_custom_call.1} parent=35 // pred_fallthru
          _
        %p388 = scmp.lt.s32.totalorder %s23, 1
        %s389 = scalar_select %p388, %s23, 1
        %s390 = scalar_lea.vmem %s4, %s389
        %p391 = scmp.lt.s32.totalorder %s23, 1
        %s392 = scalar_select %p391, %s23, 1
        %s393 = scalar_lea.vmem %s5, %s392
        // Predicated region
        $region53: #{tpu_custom_call.1} parent=35 // pred_check
          %p394 = pneg %p151
        $region54: #{tpu_custom_call.1} parent=35 // pred_check_branch
          %396 = sbr.rel (%p394) target = $region56
        $region55: #{tpu_custom_call.1} parent=35 // pred_region
          _
        $region56: #{tpu_custom_call.1} parent=35 // pred_fallthru
          _
        // Predicated region
        $region57: #{tpu_custom_call.1} parent=35 // pred_check
          %p397 = pneg %p177
        $region58: #{tpu_custom_call.1} parent=35 // pred_check_branch
          %399 = sbr.rel (%p397) target = $region60
        $region59: #{tpu_custom_call.1} parent=35 // pred_region
          _
        $region60: #{tpu_custom_call.1} parent=35 // pred_fallthru
          _
      $region36: #{tpu_custom_call.1} parent=5 // pred_fallthru
        _
      %p400 = scmp.le.s32.totalorder 2, %s14
      // Predicated region
      $region61: #{tpu_custom_call.1} parent=5 // pred_check
        %p401 = pneg %p400
      $region62: #{tpu_custom_call.1} parent=5 // pred_check_branch
        %403 = sbr.rel (%p401) target = $region64
      $region63: #{tpu_custom_call.1} parent=5 // pred_region
        %s404 = ssub.s32 %s14, 2
        // Predicated region
        $region65: #{tpu_custom_call.1} parent=63 // pred_check
          %p405 = pneg %p157
        $region66: #{tpu_custom_call.1} parent=63 // pred_check_branch
          %407 = sbr.rel (%p405) target = $region68
        $region67: #{tpu_custom_call.1} parent=63 // pred_region
          %p408 = scmp.lt.s32.totalorder %s25, 1
          %s409 = scalar_select %p408, %s25, 1
          %s410 = scalar_lea.vmem %s4, %s409
        $region68: #{tpu_custom_call.1} parent=63 // pred_fallthru
          _
        // Predicated region
        $region69: #{tpu_custom_call.1} parent=63 // pred_check
          %p411 = pneg %p183
        $region70: #{tpu_custom_call.1} parent=63 // pred_check_branch
          %413 = sbr.rel (%p411) target = $region72
        $region71: #{tpu_custom_call.1} parent=63 // pred_region
          %p414 = scmp.lt.s32.totalorder %s25, 1
          %s415 = scalar_select %p414, %s25, 1
          %s416 = scalar_lea.vmem %s5, %s415
        $region72: #{tpu_custom_call.1} parent=63 // pred_fallthru
          _
      $region64: #{tpu_custom_call.1} parent=5 // pred_fallthru
        _
    $region6: #{tpu_custom_call.1} parent=1 // loop_footer
      %s18 = sadd.s32 1, %s14
    $region7: #{tpu_custom_call.1} parent=1 // loop_footer_branch
      %13 = sbr.rel target = $region3
    $region8: #{tpu_custom_call.1} parent=1 // loop_exit
      _
    %417 = vsyncpa [#allocation4], 1
    %s418 = scalar_lea.sflag [#allocation4], 1
    %419 = vsyncpa %s418, 1
    %420 = vsyncpa [#allocation6], 1

</llo_original>
